<compile_context>
chip_gen: v5e
topology: v5e:2x2
jax: 0.10.0
libtpu: 0.0.40
codegen_flags: <defaults>
</compile_context>

<pallas_src>
import math

import jax
import jax.numpy as jnp
from jax.experimental import pallas as pl
from jax.experimental.pallas import tpu as pltpu

LOG_2PI = math.log(2.0 * math.pi)
_LANES = 128
_SUBLANES = 8


def _cdiv(a, b):
    return -(-a // b)


def _round_up(x, m):
    return _cdiv(x, m) * m


def _quad_sum_kernel(z_ref, inv_scale_ref, shift_ref, out_ref):
    """Accumulates per-lane partial sums of ((z - shift) * inv_scale)**2.

    Grid = (core, sample-block); the sample-block axis is the reduction axis,
    the output block is resident across it (accumulator pattern).
    """
    i = pl.program_id(1)

    @pl.when(i == 0)
    def _init():
        out_ref[...] = jnp.zeros_like(out_ref)

    u = (z_ref[...].astype(jnp.float32) - shift_ref[...]) * inv_scale_ref[...]
    # 128 per-lane partial accumulators; the single full cross-lane reduction
    # is deferred to the wrapper (runs once, not once per grid step).
    out_ref[0:1, :] += jnp.sum(u * u, axis=0, keepdims=True)


def kl_gen_loss(z, log_scale, shift, reduction="mean", dequant_std=0.0,
                key=None, block_rows=2048, num_cores=2):
    """-reduce(log_q(z)) for an affine flow. z: (N, D); log_scale/shift: (1, D)."""
    if reduction not in ("mean", "sum"):
        # TODO(synk): reduction='none' (per-sample -log_q output) needs a
        # per-sample output layout; only fused 'mean'/'sum' are kernelized.
        raise ValueError(f"reduction should be 'mean' or 'sum', got {reduction}.")

    n, d = z.shape
    z = z.astype(jnp.float32)
    log_scale = jnp.reshape(log_scale, (1, d)).astype(jnp.float32)
    shift = jnp.reshape(shift, (1, d)).astype(jnp.float32)

    # Dequantization noise (stochastic part of the loss) is JAX glue.
    if dequant_std > 0.0:
        if key is None:
            key = jax.random.PRNGKey(0)
        z = z + dequant_std * jax.random.normal(key, z.shape, dtype=z.dtype)

    if _LANES % d != 0:
        # TODO(synk): lane-dense repacking assumes D divides 128; other feature
        # widths would need a per-feature (D-on-lanes) layout, not implemented.
        raise NotImplementedError(f"feature dim {d} must divide {_LANES}")

    samples_per_row = _LANES // d
    rows_needed = _cdiv(n, samples_per_row)
    rows_per_core = _cdiv(rows_needed, num_cores)
    block_rows_eff = min(block_rows, _round_up(rows_per_core, _SUBLANES))
    block_rows_eff = _round_up(block_rows_eff, _SUBLANES)
    blocks_per_core = _cdiv(rows_per_core, block_rows_eff)
    rows_per_core = blocks_per_core * block_rows_eff
    total_rows = rows_per_core * num_cores
    n_pad = total_rows * samples_per_row

    # Pad the sample axis with rows equal to `shift`:  (shift - shift) * s == 0,
    # so padding contributes exactly zero to the quadratic sum.
    if n_pad > n:
        pad = jnp.broadcast_to(shift, (n_pad - n, d)).astype(z.dtype)
        z = jnp.concatenate([z, pad], axis=0)

    # Lane-dense layout: each 128-lane row holds `samples_per_row` full samples.
    z_lanes = z.reshape(total_rows, _LANES)
    inv_scale_lanes = jnp.tile(jnp.exp(-log_scale), (1, samples_per_row))   # (1, 128)
    shift_lanes = jnp.tile(shift, (1, samples_per_row))                     # (1, 128)

    partials = pl.pallas_call(
        _quad_sum_kernel,
        out_shape=jax.ShapeDtypeStruct((num_cores * _SUBLANES, _LANES), jnp.float32),
        grid_spec=pltpu.PrefetchScalarGridSpec(
            num_scalar_prefetch=0,
            grid=(num_cores, blocks_per_core),
            in_specs=[
                pl.BlockSpec((block_rows_eff, _LANES),
                             lambda c, i: (c * blocks_per_core + i, 0)),   # z tile
                pl.BlockSpec((1, _LANES), lambda c, i: (0, 0)),            # inv_scale
                pl.BlockSpec((1, _LANES), lambda c, i: (0, 0)),            # shift
            ],
            out_specs=pl.BlockSpec((_SUBLANES, _LANES), lambda c, i: (c, 0)),
        ),
        compiler_params=pltpu.CompilerParams(
            dimension_semantics=("parallel", "arbitrary"),
        ),
    )(z_lanes, inv_scale_lanes, shift_lanes)

    quad_sum = jnp.sum(partials)                       # one cross-lane reduce total
    const_per_sample = 0.5 * d * LOG_2PI + jnp.sum(log_scale)
    loss_sum = 0.5 * quad_sum + n * const_per_sample   # == -sum_n log_q(z_n)
    if reduction == "mean":
        return loss_sum / n
    return loss_sum


if __name__ == "__main__":
    key = jax.random.PRNGKey(0)
    num_samples, dim = 128, 32
    k1, k2, k3 = jax.random.split(key, 3)

    # Data samples and deterministic affine-flow parameters.
    z = jax.random.normal(k1, (num_samples, dim), dtype=jnp.float32)
    log_scale = 0.1 * jax.random.normal(k2, (1, dim), dtype=jnp.float32)
    shift = 0.1 * jax.random.normal(k3, (1, dim), dtype=jnp.float32)

    loss_mean = jax.block_until_ready(
        kl_gen_loss(z, log_scale, shift, reduction="mean", dequant_std=0.0))
    loss_sum = jax.block_until_ready(
        kl_gen_loss(z, log_scale, shift, reduction="sum", dequant_std=0.0))

    # Pure-JAX reference of the same forward (dequant_std = 0.0, module default).
    u = (z - shift) * jnp.exp(-log_scale)
    log_q = -0.5 * jnp.sum(u * u, axis=-1) - 0.5 * dim * LOG_2PI - jnp.sum(log_scale)
    ref_mean = -jnp.mean(log_q)
    ref_sum = -jnp.sum(log_q)

    assert jnp.allclose(loss_mean, ref_mean, rtol=1e-5, atol=1e-5), (loss_mean, ref_mean)
    assert jnp.allclose(loss_sum, ref_sum, rtol=1e-5, atol=1e-3), (loss_sum, ref_sum)
    print("KERNEL_OK")
</pallas_src>

<mosaic_0001>
module attributes {stable_mosaic.version = 11 : i64} {
  func.func @_quad_sum_kernel(%arg0: i32, %arg1: i32, %arg2: memref<16x128xf32, #tpu.memory_space<vmem>>, %arg3: memref<1x128xf32, #tpu.memory_space<vmem>>, %arg4: memref<1x128xf32, #tpu.memory_space<vmem>>, %arg5: memref<8x128xf32, #tpu.memory_space<vmem>>) attributes {dimension_semantics = [#tpu.dimension_semantics<parallel>, #tpu.dimension_semantics<arbitrary>], iteration_bounds = array<i64: 2, 1>, scalar_prefetch = 0 : i64, scratch_operands = 0 : i64, tpu.core_type = #tpu.core_type<tc>, window_params = [{transform_indices = @transform_0, window_bounds = array<i64: 16, 128>}, {pipeline_mode = #tpu.pipeline_mode<synchronous>, transform_indices = @transform_1, window_bounds = array<i64: 1, 128>}, {pipeline_mode = #tpu.pipeline_mode<synchronous>, transform_indices = @transform_2, window_bounds = array<i64: 1, 128>}, {transform_indices = @transform_3, window_bounds = array<i64: 8, 128>}]} {
    %c0_i32 = arith.constant 0 : i32
    %0 = arith.cmpi eq, %arg1, %c0_i32 : i32
    %1 = arith.extui %0 : i1 to i32
    %c0_i32_0 = arith.constant 0 : i32
    %2 = arith.cmpi ne, %1, %c0_i32_0 : i32
    scf.if %2 {
      %cst_10 = arith.constant 0.000000e+00 : f32
      %16 = vector.broadcast %cst_10 : f32 to vector<8x128xf32>
      %c0_11 = arith.constant 0 : index
      %c0_12 = arith.constant 0 : index
      %17 = vector.load %arg5[%c0_11, %c0_12] : memref<8x128xf32, #tpu.memory_space<vmem>>, vector<8x128xf32>
      tpu.vector_store %arg5[%c0_11, %c0_12], %16 {strides = array<i32>} : memref<8x128xf32, #tpu.memory_space<vmem>>, vector<8x128xf32>,
    } else {
    }
    %c0 = arith.constant 0 : index
    %c0_1 = arith.constant 0 : index
    %3 = vector.load %arg2[%c0, %c0_1] : memref<16x128xf32, #tpu.memory_space<vmem>>, vector<16x128xf32>
    %c0_2 = arith.constant 0 : index
    %c0_3 = arith.constant 0 : index
    %4 = vector.load %arg4[%c0_2, %c0_3] : memref<1x128xf32, #tpu.memory_space<vmem>>, vector<1x128xf32>
    %5 = vector.broadcast %4 : vector<1x128xf32> to vector<16x128xf32>
    %6 = arith.subf %3, %5 : vector<16x128xf32>
    %c0_4 = arith.constant 0 : index
    %c0_5 = arith.constant 0 : index
    %7 = vector.load %arg3[%c0_4, %c0_5] : memref<1x128xf32, #tpu.memory_space<vmem>>, vector<1x128xf32>
    %8 = vector.broadcast %7 : vector<1x128xf32> to vector<16x128xf32>
    %9 = arith.mulf %6, %8 : vector<16x128xf32>
    %c0_6 = arith.constant 0 : index
    %c0_7 = arith.constant 0 : index
    %10 = vector.load %arg5[%c0_6, %c0_7] : memref<8x128xf32, #tpu.memory_space<vmem>>, vector<1x128xf32>
    %11 = arith.mulf %9, %9 : vector<16x128xf32>
    %cst = arith.constant dense<0.000000e+00> : vector<128xf32>
    %12 = vector.multi_reduction <add>, %11, %cst [0] : vector<16x128xf32> to vector<128xf32>
    %13 = vector.shape_cast %12 : vector<128xf32> to vector<1x128xf32>
    %14 = arith.addf %10, %13 : vector<1x128xf32>
    %c0_8 = arith.constant 0 : index
    %c0_9 = arith.constant 0 : index
    %15 = vector.load %arg5[%c0_8, %c0_9] : memref<8x128xf32, #tpu.memory_space<vmem>>, vector<1x128xf32>
    tpu.vector_store %arg5[%c0_8, %c0_9], %14 {strides = array<i32>} : memref<8x128xf32, #tpu.memory_space<vmem>>, vector<1x128xf32>,
    return
  }
  func.func @transform_0(%arg0: i32, %arg1: i32) -> (i32, i32) {
    %c1_i32 = arith.constant 1 : i32
    %0 = arith.muli %arg0, %c1_i32 : i32
    %1 = arith.addi %0, %arg1 : i32
    %c0_i32 = arith.constant 0 : i32
    %c0_i32_0 = arith.constant 0 : i32
    return %1, %c0_i32 : i32, i32
  }
  func.func @transform_1(%arg0: i32, %arg1: i32) -> (i32, i32) {
    %c0_i32 = arith.constant 0 : i32
    %c0_i32_0 = arith.constant 0 : i32
    %c0_i32_1 = arith.constant 0 : i32
    return %c0_i32, %c0_i32_0 : i32, i32
  }
  func.func @transform_2(%arg0: i32, %arg1: i32) -> (i32, i32) {
    %c0_i32 = arith.constant 0 : i32
    %c0_i32_0 = arith.constant 0 : i32
    %c0_i32_1 = arith.constant 0 : i32
    return %c0_i32, %c0_i32_0 : i32, i32
  }
  func.func @transform_3(%arg0: i32, %arg1: i32) -> (i32, i32) {
    %c0_i32 = arith.constant 0 : i32
    %c0_i32_0 = arith.constant 0 : i32
    return %arg0, %c0_i32 : i32, i32
  }
}

</mosaic_0001>

<llo_original>
// kernel: tpu_custom_call.1
$region0: #{tpu_custom_call.1}
  #allocation0 [shape = 'u32[]', space=smem, size = 0x4, offset = 0x4, fixed_abs, tag = 'smem constant byte address 0x4 - core index']
  #allocation1 [shape = 'u32[72,128]{1,0:T(1,128)}', space=vmem, size = 0x9000, scoped, tag = 'internal scratch']
  %s0 = inlined_call_operand.hbm [shape: f32[32,128], index: 0, kind: input, shape index: {}]
  %s1 = inlined_call_operand.hbm [shape: f32[1,128], index: 1, kind: input, shape index: {}]
  %s2 = inlined_call_operand.vmem [shape: f32[1,128], index: 2, kind: input, shape index: {}]
  %s3 = inlined_call_operand.hbm [shape: f32[16,128], index: 3, kind: output, shape index: {}]
  %s4 = sld [smem:[#allocation0]]
  $region57: #{tpu_custom_call.1} parent=0
    _
  %s6 = ssub.s32 1, %s4
  %s7 = scalar_select 0, %s6, %s4
  $region1: #{tpu_custom_call.1} parent=0
    #allocation2 [shape = 'u8[16384]{0}', space=vmem, size = 0x4000, scoped, tag = 'input window, operand 0']
    #allocation3 [shape = 's32[2]{0}', space=sflag, size = 0x8, scoped, tag = 'scoped memory for tpu_custom_call.1']
    #allocation4 [shape = 's32[2]{0}', space=sflag, size = 0x8, scoped, tag = 'scoped memory for tpu_custom_call.1']
    #allocation5 [shape = 'u8[512]{0}', space=vmem, size = 0x400, scoped, tag = 'input window, operand 1, single buffered']
    #allocation6 [shape = 's32[1]{0}', space=sflag, size = 0x4, scoped, tag = 'scoped memory for tpu_custom_call.1']
    #allocation7 [shape = 'u8[8192]{0}', space=vmem, size = 0x2000, scoped, tag = 'output window, operand 0']
    %8 = vsyncpa [#allocation3], 0
    %s9 = scalar_lea.sflag [#allocation3], 1
    %10 = vsyncpa %s9, 0
    %11 = vsyncpa [#allocation6], 0
    %12 = vsyncpa [#allocation4], 0
    %s13 = scalar_lea.sflag [#allocation4], 1
    %14 = vsyncpa %s13, 0
    loop: start=0, step=1, limit=4
    $region2: #{tpu_custom_call.1} parent=1 // loop_pre_header
      _
    $region3: #{tpu_custom_call.1} parent=1 // loop_header
      %s16 = sphi 0, %s20
      %p17 = scmp.ge.s32.totalorder %s16, 4
      %s23 = sphi 0, %s35
      %s24 = sphi 0, %s31
      %s25 = sphi 0, %s23
      %s26 = sphi 0, %s24
      %s27 = sphi 0, %s25
      %s28 = sphi 0, %s26
      %s40 = sphi 0, %s42
      %s43 = sphi 0, %s40
      %s44 = sphi 0, %s43
      %s60 = sphi 0, %s44
      %s64 = sphi 0, %s64
      %s66 = sphi 0, %s64
      %s67 = sphi 0, %s66
      %s81 = sphi 0, %s67
      %s85 = sphi 0, %s85
      %s87 = sphi 0, %s85
      %s88 = sphi 0, %s87
      %s102 = sphi 0, %s88
      %s108 = sphi 0, %s110
      %s111 = sphi 0, %s108
      %s112 = sphi 0, %s111
      %s128 = sphi 0, %s112
    $region4: #{tpu_custom_call.1} parent=1 // loop_header_branch
      %19 = sbr.rel (%p17) target = $region8
    $region5: #{tpu_custom_call.1} parent=1 // loop_body
      %s21 = ssub.s32 %s16, 1
      %s22 = ssub.s32 %s16, 2
      %s29 = sadd.s32 1, %s24
      %p30 = scmp.ge.s32.totalorder %s29, 1
      %s31 = scalar_select %p30, 0, %s29
      %s32 = sadd.s32 1, %s23
      %s33 = scalar_select %p30, %s32, %s23
      %p34 = scmp.ge.s32.totalorder %s33, 2
      %s35 = scalar_select %p34, 0, %s33
      %s36 = sadd.s32 %s23, %s24
      %s37 = sadd.s32 %s35, %s31
      %s38 = ssub.s32 %s36, %s37
      %p39 = scmp.eq.s32.totalorder %s38, 0
      %s41 = sadd.s32 %s40, 1
      %s42 = scalar_select %p39, %s40, %s41
      %p45 = pneg %p39
      %p46 = scmp.eq.s32.totalorder %s16, 1
      %p47 = por %p45, %p46
      %p48 = scmp.ne.s32.totalorder %s40, %s43
      %p49 = scmp.eq.s32.totalorder %s16, 0
      %p50 = por %p48, %p49
      %p51 = scmp.ne.s32.totalorder %s40, %s43
      %p52 = scmp.eq.s32.totalorder %s21, 1
      %p53 = por %p51, %p52
      %p54 = scmp.ne.s32.totalorder %s43, %s44
      %p55 = scmp.eq.s32.totalorder %s21, 0
      %p56 = por %p54, %p55
      %p57 = scmp.ne.s32.totalorder %s43, %s44
      %p58 = scmp.eq.s32.totalorder %s22, 1
      %p59 = por %p57, %p58
      %p61 = scmp.ne.s32.totalorder %s44, %s60
      %p62 = scmp.eq.s32.totalorder %s22, 0
      %p63 = por %p61, %p62
      %s65 = sadd.s32 %s64, 1
      %p68 = scmp.eq.s32.totalorder %s16, 1
      %p69 = scmp.ne.s32.totalorder %s64, %s66
      %p70 = scmp.eq.s32.totalorder %s16, 0
      %p71 = por %p69, %p70
      %p72 = scmp.ne.s32.totalorder %s64, %s66
      %p73 = scmp.eq.s32.totalorder %s21, 1
      %p74 = por %p72, %p73
      %p75 = scmp.ne.s32.totalorder %s66, %s67
      %p76 = scmp.eq.s32.totalorder %s21, 0
      %p77 = por %p75, %p76
      %p78 = scmp.ne.s32.totalorder %s66, %s67
      %p79 = scmp.eq.s32.totalorder %s22, 1
      %p80 = por %p78, %p79
      %p82 = scmp.ne.s32.totalorder %s67, %s81
      %p83 = scmp.eq.s32.totalorder %s22, 0
      %p84 = por %p82, %p83
      %s86 = sadd.s32 %s85, 1
      %p89 = scmp.eq.s32.totalorder %s16, 1
      %p90 = scmp.ne.s32.totalorder %s85, %s87
      %p91 = scmp.eq.s32.totalorder %s16, 0
      %p92 = por %p90, %p91
      %p93 = scmp.ne.s32.totalorder %s85, %s87
      %p94 = scmp.eq.s32.totalorder %s21, 1
      %p95 = por %p93, %p94
      %p96 = scmp.ne.s32.totalorder %s87, %s88
      %p97 = scmp.eq.s32.totalorder %s21, 0
      %p98 = por %p96, %p97
      %p99 = scmp.ne.s32.totalorder %s87, %s88
      %p100 = scmp.eq.s32.totalorder %s22, 1
      %p101 = por %p99, %p100
      %p103 = scmp.ne.s32.totalorder %s88, %s102
      %p104 = scmp.eq.s32.totalorder %s22, 0
      %p105 = por %p103, %p104
      %s106 = ssub.s32 %s23, %s35
      %p107 = scmp.eq.s32.totalorder %s106, 0
      %s109 = sadd.s32 %s108, 1
      %s110 = scalar_select %p107, %s108, %s109
      %p113 = pneg %p107
      %p114 = scmp.eq.s32.totalorder %s16, 1
      %p115 = por %p113, %p114
      %p116 = scmp.ne.s32.totalorder %s108, %s111
      %p117 = scmp.eq.s32.totalorder %s16, 0
      %p118 = por %p116, %p117
      %p119 = scmp.ne.s32.totalorder %s108, %s111
      %p120 = scmp.eq.s32.totalorder %s21, 1
      %p121 = por %p119, %p120
      %p122 = scmp.ne.s32.totalorder %s111, %s112
      %p123 = scmp.eq.s32.totalorder %s21, 0
      %p124 = por %p122, %p123
      %p125 = scmp.ne.s32.totalorder %s111, %s112
      %p126 = scmp.eq.s32.totalorder %s22, 1
      %p127 = por %p125, %p126
      %p129 = scmp.ne.s32.totalorder %s112, %s128
      %p130 = scmp.eq.s32.totalorder %s22, 0
      %p131 = por %p129, %p130
      %p132 = scmp.le.s32.totalorder 1, %s16
      %p133 = scmp.lt.s32.totalorder %s16, 3
      %p134 = pnand %p132, %p133
      %p135 = pneg %p134
      // Predicated region
      $region9: #{tpu_custom_call.1} parent=5 // pred_check
        _
      $region10: #{tpu_custom_call.1} parent=5 // pred_check_branch
        %137 = sbr.rel (%p134) target = $region12
      $region11: #{tpu_custom_call.1} parent=5 // pred_region
        %s138 = ssub.s32 %s16, 1
        // Predicated region
        $region13: #{tpu_custom_call.1} parent=11 // pred_check
          %p139 = pneg %p77
        $region14: #{tpu_custom_call.1} parent=11 // pred_check_branch
          %141 = sbr.rel (%p139) target = $region16
        $region15: #{tpu_custom_call.1} parent=11 // pred_region
          %143 = vsyncadd [#allocation6], 0
          %s145 = sshll.u32 %s1, 4
          %s146 = int_to_ptr.hbm [resolvable:$true] %s145
          %s147 = sshll.u32 [#allocation5], 4
          %s148 = int_to_ptr.vmem [resolvable:$true] %s147
          %150 = dma.hbm_to_vmem [thread:$0]  %s146, 16, %s148, [#allocation6]
        $region16: #{tpu_custom_call.1} parent=11 // pred_fallthru
          _
        // Predicated region
        $region17: #{tpu_custom_call.1} parent=11 // pred_check
          %p151 = pneg %p98
        $region18: #{tpu_custom_call.1} parent=11 // pred_check_branch
          %153 = sbr.rel (%p151) target = $region20
        $region19: #{tpu_custom_call.1} parent=11 // pred_region
          _
        $region20: #{tpu_custom_call.1} parent=11 // pred_fallthru
          _
      $region12: #{tpu_custom_call.1} parent=5 // pred_fallthru
        _
      %p154 = scmp.lt.s32.totalorder %s16, 2
      // Predicated region
      $region21: #{tpu_custom_call.1} parent=5 // pred_check
        %p155 = pneg %p154
      $region22: #{tpu_custom_call.1} parent=5 // pred_check_branch
        %157 = sbr.rel (%p155) target = $region24
      $region23: #{tpu_custom_call.1} parent=5 // pred_region
        // Predicated region
        $region25: #{tpu_custom_call.1} parent=23 // pred_check
          %p158 = pneg %p50
        $region26: #{tpu_custom_call.1} parent=23 // pred_check_branch
          %160 = sbr.rel (%p158) target = $region28
        $region27: #{tpu_custom_call.1} parent=23 // pred_region
          %s161 = sand.u32 %s40, 1
          %s162 = scalar_lea.sflag [#allocation3], %s161
          %s163 = sand.u32 %s40, 1
          %s164 = smul.addr %s163, 16
          %s165 = scalar_lea.vmem [#allocation2], %s164
          %s166 = sadd.s32 %s23, %s24
          %s167 = smul.u32 2, %s166
          %169 = vsyncadd %s162, 0
          %s170 = smul.addr %s167, 8
          %s171 = scalar_lea.hbm %s0, %s170
          %s172 = sshll.u32 %s171, 4
          %s173 = int_to_ptr.hbm [resolvable:$true] %s172
          %s174 = sshll.u32 %s165, 4
          %s175 = int_to_ptr.vmem [resolvable:$true] %s174
          %180 = dma.hbm_to_vmem [thread:$0]  %s173, 256, %s175, %s162, 128, 128, 8
        $region28: #{tpu_custom_call.1} parent=23 // pred_fallthru
          _
      $region24: #{tpu_custom_call.1} parent=5 // pred_fallthru
        _
      %p181 = scmp.le.s32.totalorder 1, %s16
      %p182 = scmp.lt.s32.totalorder %s16, 3
      %p183 = pnand %p181, %p182
      %p184 = pneg %p183
      // Predicated region
      $region29: #{tpu_custom_call.1} parent=5 // pred_check
        _
      $region30: #{tpu_custom_call.1} parent=5 // pred_check_branch
        %186 = sbr.rel (%p183) target = $region32
      $region31: #{tpu_custom_call.1} parent=5 // pred_region
        %s187 = ssub.s32 %s16, 1
        %s188 = sand.u32 %s43, 1
        %s189 = scalar_lea.sflag [#allocation3], %s188
        %s190 = sand.u32 %s43, 1
        %s191 = smul.addr %s190, 16
        %s192 = scalar_lea.vmem [#allocation2], %s191
        // Predicated region
        $region33: #{tpu_custom_call.1} parent=31 // pred_check
          %p193 = pneg %p56
        $region34: #{tpu_custom_call.1} parent=31 // pred_check_branch
          %195 = sbr.rel (%p193) target = $region36
        $region35: #{tpu_custom_call.1} parent=31 // pred_region
          %197 = dma.done %s189, 256
        $region36: #{tpu_custom_call.1} parent=31 // pred_fallthru
          _
        // Predicated region
        $region37: #{tpu_custom_call.1} parent=31 // pred_check
          %p198 = pneg %p77
        $region38: #{tpu_custom_call.1} parent=31 // pred_check_branch
          %200 = sbr.rel (%p198) target = $region40
        $region39: #{tpu_custom_call.1} parent=31 // pred_region
          %202 = dma.done [#allocation6], 16
        $region40: #{tpu_custom_call.1} parent=31 // pred_fallthru
          _
        %s203 = sand.u32 %s43, 1
        %s204 = scalar_lea.sflag [#allocation3], %s203
        %s205 = sand.u32 %s43, 1
        %s206 = smul.addr %s205, 16
        %s207 = scalar_lea.vmem [#allocation2], %s206
        %p208 = pneg %p56
        %p209 = pneg %p53
        %p210 = pneg %p77
        %p211 = pneg %p74
        %p212 = pneg %p98
        %p213 = pneg %p95
        %p214 = pneg %p124
        %p215 = pneg %p121
        %s216 = sand.u32 %s111, 1
        %s217 = scalar_lea.sflag [#allocation4], %s216
        %s218 = sand.u32 %s111, 1
        %s219 = smul.addr %s218, 8
        %s220 = scalar_lea.vmem [#allocation7], %s219
        %s221 = sadd.s32 %s25, %s26
        %s222 = smul.u32 2, %s221
        %p223 = scmp.eq.s32.totalorder %s26, 0
        // Predicated region
        $region41: #{tpu_custom_call.1} parent=31 // pred_check
          %p224 = pneg %p223
        $region42: #{tpu_custom_call.1} parent=31 // pred_check_branch
          %226 = sbr.rel (%p224) target = $region44
        $region43: #{tpu_custom_call.1} parent=31 // pred_region
          %227 = vst [vmem:[%s220] sm:$0xff] 0.0
        $region44: #{tpu_custom_call.1} parent=31 // pred_fallthru
          _
        %v228 = vld [vmem:[%s192] sm:$0xff]
        %v229 = vld [vmem:[%s192 + $0x8] sm:$0xff]
        %v230 = vld [vmem:[%s2] sm:$0x1]
        %v232 = vperm.slane %v230, 0
        %v234 = vsub.f32 %v228, %v232
        %v235 = vsub.f32 %v229, %v232
        %v236 = vld [vmem:[#allocation5] sm:$0x1]
        %v238 = vperm.slane %v236, 0
        %v240 = vmul.f32 %v234, %v238
        %v241 = vmul.f32 %v235, %v238
        %v242 = vld [vmem:[%s220] sm:$0x1]
        %v243 = vmul.f32 %v240, %v240
        %v244 = vmul.f32 %v241, %v241
        %v245 = vadd.f32 %v243, %v244
        %v246 = vrot.slane %v245, 4
        %v247 = vadd.f32 %v245, %v246
        %v248 = vrot.slane %v247, 2
        %v249 = vadd.f32 %v247, %v248
        %v250 = vrot.slane %v249, 1
        %v251 = vadd.f32 %v249, %v250
        %v252 = vadd.f32 %v242, %v251
        %253 = vst [vmem:[%s220] sm:$0x1] %v252
        %s254 = sand.u32 %s111, 1
        %s255 = scalar_lea.sflag [#allocation4], %s254
        %s256 = sand.u32 %s111, 1
        %s257 = smul.addr %s256, 8
        %s258 = scalar_lea.vmem [#allocation7], %s257
        // Predicated region
        $region45: #{tpu_custom_call.1} parent=31 // pred_check
          %p259 = pneg %p121
        $region46: #{tpu_custom_call.1} parent=31 // pred_check_branch
          %261 = sbr.rel (%p259) target = $region48
        $region47: #{tpu_custom_call.1} parent=31 // pred_region
          %263 = vsyncadd %s255, 0
          %s264 = smul.addr %s25, 8
          %s265 = scalar_lea.hbm %s3, %s264
          %s267 = sshll.u32 %s258, 4
          %s268 = int_to_ptr.vmem [resolvable:$true] %s267
          %s269 = sshll.u32 %s265, 4
          %s270 = int_to_ptr.hbm [resolvable:$true] %s269
          %272 = dma.vmem_to_hbm [thread:$0]  %s268, 128, %s270, %s255
        $region48: #{tpu_custom_call.1} parent=31 // pred_fallthru
          _
      $region32: #{tpu_custom_call.1} parent=5 // pred_fallthru
        _
      %p273 = scmp.le.s32.totalorder 2, %s16
      // Predicated region
      $region49: #{tpu_custom_call.1} parent=5 // pred_check
        %p274 = pneg %p273
      $region50: #{tpu_custom_call.1} parent=5 // pred_check_branch
        %276 = sbr.rel (%p274) target = $region52
      $region51: #{tpu_custom_call.1} parent=5 // pred_region
        %s277 = ssub.s32 %s16, 2
        // Predicated region
        $region53: #{tpu_custom_call.1} parent=51 // pred_check
          %p278 = pneg %p127
        $region54: #{tpu_custom_call.1} parent=51 // pred_check_branch
          %280 = sbr.rel (%p278) target = $region56
        $region55: #{tpu_custom_call.1} parent=51 // pred_region
          %s281 = sand.u32 %s112, 1
          %s282 = scalar_lea.sflag [#allocation4], %s281
          %s283 = sand.u32 %s112, 1
          %s284 = smul.addr %s283, 8
          %s285 = scalar_lea.vmem [#allocation7], %s284
          %287 = dma.done %s282, 128
        $region56: #{tpu_custom_call.1} parent=51 // pred_fallthru
          _
      $region52: #{tpu_custom_call.1} parent=5 // pred_fallthru
        _
    $region6: #{tpu_custom_call.1} parent=1 // loop_footer
      %s20 = sadd.s32 1, %s16
    $region7: #{tpu_custom_call.1} parent=1 // loop_footer_branch
      %15 = sbr.rel target = $region3
    $region8: #{tpu_custom_call.1} parent=1 // loop_exit
      _
    %288 = vsyncpa [#allocation3], 1
    %s289 = scalar_lea.sflag [#allocation3], 1
    %290 = vsyncpa %s289, 1
    %291 = vsyncpa [#allocation6], 1
    %292 = vsyncpa [#allocation4], 1
    %s293 = scalar_lea.sflag [#allocation4], 1
    %294 = vsyncpa %s293, 1

</llo_original>
